<compile_context>
chip_gen: v6e
topology: v6e:2x2x1
jax: 0.10.0
libtpu: 0.0.40
codegen_flags: <defaults>
</compile_context>

<pallas_src>
import math

import jax
import jax.numpy as jnp
from jax import lax
from jax.experimental import pallas as pl
from jax.experimental.pallas import tpu as pltpu

EPS = 0.1        # regularization coefficient (module __init__ arg)
MAX_ITER = 100   # max Sinkhorn iterations (module __init__ arg)
THRESH = 0.1     # convergence threshold (hard-coded in forward)
REDUCTION = "mean"

_BIG = 1e30      # finite "+infinity" baked into padded entries of Ceps


def _round_up(a, b):
    return (a + b - 1) // b * b


def _make_sinkhorn_kernel(N, P1, P2, P1p, P2p):
    inv_eps = 1.0 / EPS
    log_mu = math.log(1.0 / P1 + 1e-8)   # mu = 1/P1 (uniform)
    log_nu = math.log(1.0 / P2 + 1e-8)   # nu = 1/P2 (uniform)
    err_scale = EPS / N                  # mean_b(sum_i |du|) = eps/N * sum|d(u/eps)|
    need_row = (P1p != P1)
    need_col = (P2p != P2)

    def kernel(x_ref, y_ref, cost_ref, pi_ref, c_ref):
        x = x_ref[...]                                      # (N, P1p, D) f32
        y = y_ref[...]                                      # (N, P2p, D) f32

        # ---- cost matrix on the MXU ---------------------------------------
        x2 = jnp.sum(x * x, axis=-1, keepdims=True)         # (N, P1p, 1)
        y2 = jnp.sum(y * y, axis=-1)[:, None, :]            # (N, 1, P2p)
        xy = jnp.einsum("bid,bjd->bij", x, y,
                        preferred_element_type=jnp.float32) # (N, P1p, P2p)
        C = jnp.maximum(x2 + y2 - 2.0 * xy, 0.0)            # clamp: parity with |x-y|^2
        c_ref[...] = C                                       # write back early
        Ceps = C * inv_eps                                   # hoisted 1/eps

        # ---- bake padding into Ceps ONCE (no per-iteration plane masks) ----
        if need_row or need_col:
            pad = None
            if need_row:
                pad = lax.broadcasted_iota(jnp.int32, (N, P1p, P2p), 1) >= P1
            if need_col:
                colp = lax.broadcasted_iota(jnp.int32, (N, P1p, P2p), 2) >= P2
                pad = colp if pad is None else jnp.logical_or(pad, colp)
            Ceps = jnp.where(pad, _BIG, Ceps)
        if need_row:
            row_mask_u = lax.broadcasted_iota(jnp.int32, (N, P1p, 1), 1) < P1
        if need_col:
            col_mask_v = lax.broadcasted_iota(jnp.int32, (N, 1, P2p), 2) < P2

        def lse_last(a):                                     # logsumexp over j
            m = jnp.max(a, axis=-1, keepdims=True)
            return m + jnp.log(jnp.sum(jnp.exp(a - m), axis=-1, keepdims=True))

        def lse_mid(a):                                      # logsumexp over i
            m = jnp.max(a, axis=-2, keepdims=True)
            return m + jnp.log(jnp.sum(jnp.exp(a - m), axis=-2, keepdims=True))

        def cond(carry):
            it, err, _, _ = carry
            return jnp.logical_and(it < MAX_ITER, err >= THRESH)

        def body(carry):
            it, _, u, v = carry                              # eps-scaled duals
            A = v - Ceps                                     # (N, P1p, P2p), reused twice
            # lse identity: lse_j(u - Ceps + v) = u + lse_j(v - Ceps)
            u_new = log_mu - lse_last(A)                     # (N, P1p, 1)
            if need_row:
                u_new = jnp.where(row_mask_u, u_new, 0.0)    # keep padded rows inert
            M2 = u_new + A                                   # M(C, u_new, v)/eps, no M1 plane
            v_new = (log_nu - lse_mid(M2)) + v               # (N, 1, P2p)
            if need_col:
                v_new = jnp.where(col_mask_v, v_new, 0.0)    # keep padded cols inert
            # reference stopping rule: batch-mean L1 change of u, checked after both updates
            err = err_scale * jnp.sum(jnp.abs(u_new - u))
            return it + 1, err, u_new, v_new

        u0 = jnp.zeros((N, P1p, 1), jnp.float32)
        v0 = jnp.zeros((N, 1, P2p), jnp.float32)
        carry0 = (jnp.int32(0), jnp.float32(_BIG), u0, v0)
        _, _, u, v = lax.while_loop(cond, body, carry0)

        # ---- transport plan & reduced cost ---------------------------------
        pi = jnp.exp((u - Ceps) + v)                         # padded entries -> exactly 0
        pi_ref[...] = pi
        # reduction='mean': mean_b(sum_{ij} pi*C) == eps * sum(pi*Ceps) / N
        # (padded entries contribute 0 * _BIG = 0; no re-read of the C plane)
        cost_ref[0, 0] = (EPS / N) * jnp.sum(pi * Ceps)

    return kernel


def _vmem_limit_bytes(estimate):
    """Generation-aware scoped-VMEM limit with headroom (v5e/v6e 128 MiB, v7x 64 MiB)."""
    try:
        cap = int(pltpu.get_tpu_info().vmem_capacity_bytes)
    except Exception:
        cap = 64 << 20  # conservative fallback valid on every generation
    usable = int(cap * 0.90)
    return int(min(max(estimate, 32 << 20), usable))


@jax.jit
def sinkhorn_distance(x, y):
    """Pallas implementation of SinkhornDistance(EPS, MAX_ITER, 'mean').forward."""
    N, P1, D = x.shape
    Ny, P2, Dy = y.shape
    assert N == Ny and D == Dy, "batch / feature dims of x and y must match"

    # Pad only the point dims: P1 -> sublane multiple (8), P2 -> lane multiple (128),
    # so the iteration planes and pi/C writebacks are lane-dense.  D is left unpadded.
    P1p = _round_up(P1, 8)
    P2p = _round_up(P2, 128)
    xp = jnp.pad(x.astype(jnp.float32), ((0, 0), (0, P1p - P1), (0, 0)))
    yp = jnp.pad(y.astype(jnp.float32), ((0, 0), (0, P2p - P2), (0, 0)))

    # Resident-set estimate: Ceps + loop temps (A, exp, M2) + pi/C outputs + one-time
    # mask bake ~ 9 planes, plus padded inputs and headroom.
    plane = N * P1p * P2p * 4
    io = (xp.size + yp.size) * 4
    vmem_limit = _vmem_limit_bytes(9 * plane + 2 * io + (4 << 20))

    kernel = _make_sinkhorn_kernel(N, P1, P2, P1p, P2p)
    vmem = pl.BlockSpec(memory_space=pltpu.MemorySpace.VMEM)
    smem = pl.BlockSpec(memory_space=pltpu.MemorySpace.SMEM)
    cost, pi_p, c_p = pl.pallas_call(
        kernel,
        out_shape=(
            jax.ShapeDtypeStruct((1, 1), jnp.float32),          # reduced cost
            jax.ShapeDtypeStruct((N, P1p, P2p), jnp.float32),   # pi (lane-dense, padded)
            jax.ShapeDtypeStruct((N, P1p, P2p), jnp.float32),   # C  (lane-dense, padded)
        ),
        in_specs=[vmem, vmem],
        out_specs=(smem, vmem, vmem),
        compiler_params=pltpu.CompilerParams(vmem_limit_bytes=vmem_limit),
    )(xp, yp)

    # Slice the padding back off outside the kernel (keeps the writeback lane-dense).
    return cost[0, 0], pi_p[:, :P1, :P2], c_p[:, :P1, :P2]


if __name__ == "__main__":
    key = jax.random.PRNGKey(0)
    kx, ky = jax.random.split(key)
    # x: (N, P1, D), y: (N, P2, D) — small synthetic point clouds.
    x = jax.random.normal(kx, (2, 16, 4), dtype=jnp.float32)
    y = jax.random.normal(ky, (2, 8, 4), dtype=jnp.float32)

    cost, pi, C = sinkhorn_distance(x, y)
    jax.block_until_ready((cost, pi, C))
    print("KERNEL_OK")
</pallas_src>

<mosaic_0001>
module attributes {stable_mosaic.version = 11 : i64} {
  func.func @kernel(%arg0: memref<2x16x4xf32, #tpu.memory_space<vmem>>, %arg1: memref<2x128x4xf32, #tpu.memory_space<vmem>>, %arg2: memref<1x1xf32, #tpu.memory_space<smem>>, %arg3: memref<2x16x128xf32, #tpu.memory_space<vmem>>, %arg4: memref<2x16x128xf32, #tpu.memory_space<vmem>>) attributes {dimension_semantics = [], scalar_prefetch = 0 : i64, scratch_operands = 0 : i64, tpu.core_type = #tpu.core_type<tc>} {
    %c0 = arith.constant 0 : index
    %c0_0 = arith.constant 0 : index
    %c0_1 = arith.constant 0 : index
    %0 = vector.load %arg0[%c0, %c0_0, %c0_1] : memref<2x16x4xf32, #tpu.memory_space<vmem>>, vector<2x16x4xf32>
    %c0_2 = arith.constant 0 : index
    %c0_3 = arith.constant 0 : index
    %c0_4 = arith.constant 0 : index
    %1 = vector.load %arg1[%c0_2, %c0_3, %c0_4] : memref<2x128x4xf32, #tpu.memory_space<vmem>>, vector<2x128x4xf32>
    %2 = arith.mulf %0, %0 : vector<2x16x4xf32>
    %cst = arith.constant dense<0.000000e+00> : vector<2x16xf32>
    %3 = vector.multi_reduction <add>, %2, %cst [2] : vector<2x16x4xf32> to vector<2x16xf32>
    %4 = vector.shape_cast %3 : vector<2x16xf32> to vector<2x16x1xf32>
    %5 = arith.mulf %1, %1 : vector<2x128x4xf32>
    %cst_5 = arith.constant dense<0.000000e+00> : vector<2x128xf32>
    %6 = vector.multi_reduction <add>, %5, %cst_5 [2] : vector<2x128x4xf32> to vector<2x128xf32>
    %7 = vector.shape_cast %6 : vector<2x128xf32> to vector<2x1x128xf32>
    "tpu.trace_start"() <{level = 10 : i32, message = "bid,bjd->bij"}> : () -> ()
    %cst_6 = arith.constant dense<0.000000e+00> : vector<2x16x128xf32>
    %8 = tpu.matmul %0, %1, %cst_6 {dimension_numbers = #tpu.dot_dimension_numbers<[2], [2], [1], [1], [0, 0, 0, 1, 1, 1], [0], [0]>} : vector<2x16x4xf32>, vector<2x128x4xf32>, vector<2x16x128xf32> -> vector<2x16x128xf32>
    "tpu.trace_stop"() : () -> ()
    %9 = vector.broadcast %4 : vector<2x16x1xf32> to vector<2x16x128xf32>
    %10 = vector.broadcast %7 : vector<2x1x128xf32> to vector<2x16x128xf32>
    %11 = arith.addf %9, %10 : vector<2x16x128xf32>
    %cst_7 = arith.constant 2.000000e+00 : f32
    %12 = vector.broadcast %cst_7 : f32 to vector<2x16x128xf32>
    %13 = arith.mulf %12, %8 : vector<2x16x128xf32>
    %14 = arith.subf %11, %13 : vector<2x16x128xf32>
    %cst_8 = arith.constant 0.000000e+00 : f32
    %15 = vector.broadcast %cst_8 : f32 to vector<2x16x128xf32>
    %16 = arith.maximumf %14, %15 : vector<2x16x128xf32>
    %c0_9 = arith.constant 0 : index
    %c0_10 = arith.constant 0 : index
    %c0_11 = arith.constant 0 : index
    %17 = vector.load %arg4[%c0_9, %c0_10, %c0_11] : memref<2x16x128xf32, #tpu.memory_space<vmem>>, vector<2x16x128xf32>
    tpu.vector_store %arg4[%c0_9, %c0_10, %c0_11], %16 {strides = array<i32>} : memref<2x16x128xf32, #tpu.memory_space<vmem>>, vector<2x16x128xf32>,
    %cst_12 = arith.constant 1.000000e+01 : f32
    %18 = vector.broadcast %cst_12 : f32 to vector<2x16x128xf32>
    %19 = arith.mulf %16, %18 : vector<2x16x128xf32>
    %20 = tpu.iota {dimensions = array<i32: 2>} : vector<2x16x128xi32>
    %c8_i32 = arith.constant 8 : i32
    %21 = vector.broadcast %c8_i32 : i32 to vector<2x16x128xi32>
    %22 = arith.cmpi sge, %20, %21 : vector<2x16x128xi32>
    %cst_13 = arith.constant 1.000000e+30 : f32
    %23 = vector.broadcast %cst_13 : f32 to vector<2x16x128xf32>
    %24 = arith.select %22, %23, %19 : vector<2x16x128xi1>, vector<2x16x128xf32>
    %25 = tpu.iota {dimensions = array<i32: 2>} : vector<2x1x128xi32>
    %c8_i32_14 = arith.constant 8 : i32
    %26 = vector.broadcast %c8_i32_14 : i32 to vector<2x1x128xi32>
    %27 = arith.cmpi slt, %25, %26 : vector<2x1x128xi32>
    %cst_15 = arith.constant 0.000000e+00 : f32
    %28 = vector.broadcast %cst_15 : f32 to vector<2x16x1xf32>
    %cst_16 = arith.constant 0.000000e+00 : f32
    %29 = vector.broadcast %cst_16 : f32 to vector<2x1x128xf32>
    %c0_i32 = arith.constant 0 : i32
    %cst_17 = arith.constant 1.000000e+30 : f32
    %30:4 = scf.while (%arg5 = %c0_i32, %arg6 = %cst_17, %arg7 = %28, %arg8 = %29) : (i32, f32, vector<2x16x1xf32>, vector<2x1x128xf32>) -> (i32, f32, vector<2x16x1xf32>, vector<2x1x128xf32>) {
      %c100_i32 = arith.constant 100 : i32
      %44 = arith.cmpi slt, %arg5, %c100_i32 : i32
      %cst_25 = arith.constant 1.000000e-01 : f32
      %45 = arith.cmpf oge, %arg6, %cst_25 : f32
      %46 = arith.andi %44, %45 : i1
      scf.condition(%46) %arg5, %arg6, %arg7, %arg8 : i32, f32, vector<2x16x1xf32>, vector<2x1x128xf32>
    } do {
    ^bb0(%arg5: i32, %arg6: f32, %arg7: vector<2x16x1xf32>, %arg8: vector<2x1x128xf32>):
      %44 = vector.broadcast %arg8 : vector<2x1x128xf32> to vector<2x16x128xf32>
      %45 = arith.subf %44, %24 : vector<2x16x128xf32>
      %cst_25 = arith.constant dense<0xFF800000> : vector<2x16xf32>
      %46 = vector.multi_reduction <maximumf>, %45, %cst_25 [2] : vector<2x16x128xf32> to vector<2x16xf32>
      %47 = vector.shape_cast %46 : vector<2x16xf32> to vector<2x16x1xf32>
      %48 = vector.broadcast %47 : vector<2x16x1xf32> to vector<2x16x128xf32>
      %49 = arith.subf %45, %48 : vector<2x16x128xf32>
      %50 = math.exp %49 : vector<2x16x128xf32>
      %cst_26 = arith.constant dense<0.000000e+00> : vector<2x16xf32>
      %51 = vector.multi_reduction <add>, %50, %cst_26 [2] : vector<2x16x128xf32> to vector<2x16xf32>
      %52 = vector.shape_cast %51 : vector<2x16xf32> to vector<2x16x1xf32>
      %53 = math.log %52 : vector<2x16x1xf32>
      %54 = arith.addf %47, %53 : vector<2x16x1xf32>
      %cst_27 = arith.constant -2.77258849 : f32
      %55 = vector.broadcast %cst_27 : f32 to vector<2x16x1xf32>
      %56 = arith.subf %55, %54 : vector<2x16x1xf32>
      %57 = vector.broadcast %56 : vector<2x16x1xf32> to vector<2x16x128xf32>
      %58 = arith.addf %57, %45 : vector<2x16x128xf32>
      %cst_28 = arith.constant dense<0xFF800000> : vector<2x128xf32>
      %59 = vector.multi_reduction <maximumf>, %58, %cst_28 [1] : vector<2x16x128xf32> to vector<2x128xf32>
      %60 = vector.shape_cast %59 : vector<2x128xf32> to vector<2x1x128xf32>
      %61 = vector.broadcast %60 : vector<2x1x128xf32> to vector<2x16x128xf32>
      %62 = arith.subf %58, %61 : vector<2x16x128xf32>
      %63 = math.exp %62 : vector<2x16x128xf32>
      %cst_29 = arith.constant dense<0.000000e+00> : vector<2x128xf32>
      %64 = vector.multi_reduction <add>, %63, %cst_29 [1] : vector<2x16x128xf32> to vector<2x128xf32>
      %65 = vector.shape_cast %64 : vector<2x128xf32> to vector<2x1x128xf32>
      %66 = math.log %65 : vector<2x1x128xf32>
      %67 = arith.addf %60, %66 : vector<2x1x128xf32>
      %cst_30 = arith.constant -2.07944155 : f32
      %68 = vector.broadcast %cst_30 : f32 to vector<2x1x128xf32>
      %69 = arith.subf %68, %67 : vector<2x1x128xf32>
      %70 = arith.addf %69, %arg8 : vector<2x1x128xf32>
      %cst_31 = arith.constant 0.000000e+00 : f32
      %71 = vector.broadcast %cst_31 : f32 to vector<2x1x128xf32>
      %72 = arith.select %27, %70, %71 : vector<2x1x128xi1>, vector<2x1x128xf32>
      %73 = arith.subf %56, %arg7 : vector<2x16x1xf32>
      %74 = math.absf %73 : vector<2x16x1xf32>
      %75 = vector.shape_cast %74 : vector<2x16x1xf32> to vector<1x2x16x1xf32>
      %cst_32 = arith.constant dense<0.000000e+00> : vector<1xf32>
      %76 = vector.multi_reduction <add>, %75, %cst_32 [1, 2, 3] : vector<1x2x16x1xf32> to vector<1xf32>
      %77 = vector.shape_cast %76 : vector<1xf32> to vector<1x1x1x1xf32>
      %78 = vector.extract %77[0, 0, 0, 0] : f32 from vector<1x1x1x1xf32>
      %cst_33 = arith.constant 5.000000e-02 : f32
      %79 = arith.mulf %cst_33, %78 : f32
      %c1_i32 = arith.constant 1 : i32
      %80 = arith.addi %arg5, %c1_i32 : i32
      scf.yield %80, %79, %56, %72 : i32, f32, vector<2x16x1xf32>, vector<2x1x128xf32>
    }
    %31 = vector.broadcast %30#2 : vector<2x16x1xf32> to vector<2x16x128xf32>
    %32 = arith.subf %31, %24 : vector<2x16x128xf32>
    %33 = vector.broadcast %30#3 : vector<2x1x128xf32> to vector<2x16x128xf32>
    %34 = arith.addf %32, %33 : vector<2x16x128xf32>
    %35 = math.exp %34 : vector<2x16x128xf32>
    %c0_18 = arith.constant 0 : index
    %c0_19 = arith.constant 0 : index
    %c0_20 = arith.constant 0 : index
    %36 = vector.load %arg3[%c0_18, %c0_19, %c0_20] : memref<2x16x128xf32, #tpu.memory_space<vmem>>, vector<2x16x128xf32>
    tpu.vector_store %arg3[%c0_18, %c0_19, %c0_20], %35 {strides = array<i32>} : memref<2x16x128xf32, #tpu.memory_space<vmem>>, vector<2x16x128xf32>,
    %37 = arith.mulf %35, %24 : vector<2x16x128xf32>
    %38 = vector.shape_cast %37 : vector<2x16x128xf32> to vector<1x2x16x128xf32>
    %cst_21 = arith.constant dense<0.000000e+00> : vector<1xf32>
    %39 = vector.multi_reduction <add>, %38, %cst_21 [1, 2, 3] : vector<1x2x16x128xf32> to vector<1xf32>
    %40 = vector.shape_cast %39 : vector<1xf32> to vector<1x1x1x1xf32>
    %41 = vector.extract %40[0, 0, 0, 0] : f32 from vector<1x1x1x1xf32>
    %cst_22 = arith.constant 5.000000e-02 : f32
    %42 = arith.mulf %cst_22, %41 : f32
    %c0_23 = arith.constant 0 : index
    %c0_24 = arith.constant 0 : index
    %43 = memref.load %arg2[%c0_23, %c0_24] : memref<1x1xf32, #tpu.memory_space<smem>>
    memref.store %42, %arg2[%c0_23, %c0_24] : memref<1x1xf32, #tpu.memory_space<smem>>
    return
  }
}

</mosaic_0001>

<llo_original>
// kernel: sinkhorn_distance.1
$region0: #{sinkhorn_distance.1}
  #allocation0 [shape = 'u32[]', space=smem, size = 0x4, offset = 0x4, fixed_abs, tag = 'smem constant byte address 0x4 - core index']
  #allocation1 [shape = 'u32[144,128]{1,0:T(1,128)}', space=vmem, size = 0x12000, scoped, tag = 'internal scratch']
  %s0 = inlined_call_operand.vmem [shape: f32[2,16,4], index: 0, kind: input, shape index: {}]
  %s1 = inlined_call_operand.vmem [shape: f32[2,128,4], index: 1, kind: input, shape index: {}]
  %s2 = inlined_call_operand.hbm [shape: f32[1,1], index: 2, kind: output, shape index: {0}]
  %s3 = inlined_call_operand.vmem [shape: f32[2,16,128], index: 3, kind: output, shape index: {1}]
  %s4 = inlined_call_operand.vmem [shape: f32[2,16,128], index: 4, kind: output, shape index: {2}]
  %5 = xla_tuple %s2, %s3, %s4
  %s6 = sld [smem:[#allocation0]]
  $region41: #{sinkhorn_distance.1} parent=0
    _
  %s8 = ssub.s32 1, %s6
  %s9 = scalar_select 0, %s8, %s6
  $region1: #{sinkhorn_distance.1} parent=0
    #allocation2 [shape = 'u8[512]{0}', space=smem, size = 0x200, scoped, tag = 'output window, operand 0, single buffered']
    #allocation3 [shape = 's32[1]{0}', space=sflag, size = 0x4, scoped, tag = 'scoped memory for sinkhorn_distance.1']
    %10 = vsyncpa [#allocation3], 0
    // Predicated region
    $region2: #{sinkhorn_distance.1} parent=1 // pred_check
      _
    $region3: #{sinkhorn_distance.1} parent=1 // pred_check_branch
      %12 = sbr.rel (0) target = $region5
    $region4: #{sinkhorn_distance.1} parent=1 // pred_region
      _
    $region5: #{sinkhorn_distance.1} parent=1 // pred_fallthru
      _
    // Predicated region
    $region6: #{sinkhorn_distance.1} parent=1 // pred_check
      _
    $region7: #{sinkhorn_distance.1} parent=1 // pred_check_branch
      %14 = sbr.rel (0) target = $region9
    $region8: #{sinkhorn_distance.1} parent=1 // pred_region
      _
    $region9: #{sinkhorn_distance.1} parent=1 // pred_fallthru
      _
    %v15 = vld [vmem:[%s0] sm:$0xff]
    %v16 = vld [vmem:[%s0 + $0x8] sm:$0xff]
    %v17 = vld [vmem:[%s0 + $0x10] sm:$0xff]
    %v18 = vld [vmem:[%s0 + $0x18] sm:$0xff]
    %v19 = vld [vmem:[%s1] sm:$0xff]
    %v20 = vld [vmem:[%s1 + $0x8] sm:$0xff]
    %v21 = vld [vmem:[%s1 + $0x10] sm:$0xff]
    %v22 = vld [vmem:[%s1 + $0x18] sm:$0xff]
    %v23 = vld [vmem:[%s1 + $0x20] sm:$0xff]
    %v24 = vld [vmem:[%s1 + $0x28] sm:$0xff]
    %v25 = vld [vmem:[%s1 + $0x30] sm:$0xff]
    %v26 = vld [vmem:[%s1 + $0x38] sm:$0xff]
    %v27 = vld [vmem:[%s1 + $0x40] sm:$0xff]
    %v28 = vld [vmem:[%s1 + $0x48] sm:$0xff]
    %v29 = vld [vmem:[%s1 + $0x50] sm:$0xff]
    %v30 = vld [vmem:[%s1 + $0x58] sm:$0xff]
    %v31 = vld [vmem:[%s1 + $0x60] sm:$0xff]
    %v32 = vld [vmem:[%s1 + $0x68] sm:$0xff]
    %v33 = vld [vmem:[%s1 + $0x70] sm:$0xff]
    %v34 = vld [vmem:[%s1 + $0x78] sm:$0xff]
    %v35 = vld [vmem:[%s1 + $0x80] sm:$0xff]
    %v36 = vld [vmem:[%s1 + $0x88] sm:$0xff]
    %v37 = vld [vmem:[%s1 + $0x90] sm:$0xff]
    %v38 = vld [vmem:[%s1 + $0x98] sm:$0xff]
    %v39 = vld [vmem:[%s1 + $0xa0] sm:$0xff]
    %v40 = vld [vmem:[%s1 + $0xa8] sm:$0xff]
    %v41 = vld [vmem:[%s1 + $0xb0] sm:$0xff]
    %v42 = vld [vmem:[%s1 + $0xb8] sm:$0xff]
    %v43 = vld [vmem:[%s1 + $0xc0] sm:$0xff]
    %v44 = vld [vmem:[%s1 + $0xc8] sm:$0xff]
    %v45 = vld [vmem:[%s1 + $0xd0] sm:$0xff]
    %v46 = vld [vmem:[%s1 + $0xd8] sm:$0xff]
    %v47 = vld [vmem:[%s1 + $0xe0] sm:$0xff]
    %v48 = vld [vmem:[%s1 + $0xe8] sm:$0xff]
    %v49 = vld [vmem:[%s1 + $0xf0] sm:$0xff]
    %v50 = vld [vmem:[%s1 + $0xf8] sm:$0xff]
    %v51 = vmul.f32 %v15, %v15
    %v52 = vmul.f32 %v16, %v16
    %v53 = vmul.f32 %v17, %v17
    %v54 = vmul.f32 %v18, %v18
    %vm55 = vcmask 31744
    %v56 = vsel %vm55, %v51, 0.0
    %57 = vadd.xlane.f32.xlu0 %v56
    %v58 = vpop.xlane.xlu0 %57
    %v59 = vsel %vm55, %v52, 0.0
    %60 = vadd.xlane.f32.xlu0 %v59
    %v61 = vpop.xlane.xlu0 %60
    %v62 = vsel %vm55, %v53, 0.0
    %63 = vadd.xlane.f32.xlu0 %v62
    %v64 = vpop.xlane.xlu0 %63
    %v65 = vsel %vm55, %v54, 0.0
    %66 = vadd.xlane.f32.xlu0 %v65
    %v67 = vpop.xlane.xlu0 %66
    %v68 = vmul.f32 %v19, %v19
    %v69 = vmul.f32 %v20, %v20
    %v70 = vmul.f32 %v21, %v21
    %v71 = vmul.f32 %v22, %v22
    %v72 = vmul.f32 %v23, %v23
    %v73 = vmul.f32 %v24, %v24
    %v74 = vmul.f32 %v25, %v25
    %v75 = vmul.f32 %v26, %v26
    %v76 = vmul.f32 %v27, %v27
    %v77 = vmul.f32 %v28, %v28
    %v78 = vmul.f32 %v29, %v29
    %v79 = vmul.f32 %v30, %v30
    %v80 = vmul.f32 %v31, %v31
    %v81 = vmul.f32 %v32, %v32
    %v82 = vmul.f32 %v33, %v33
    %v83 = vmul.f32 %v34, %v34
    %v84 = vmul.f32 %v35, %v35
    %v85 = vmul.f32 %v36, %v36
    %v86 = vmul.f32 %v37, %v37
    %v87 = vmul.f32 %v38, %v38
    %v88 = vmul.f32 %v39, %v39
    %v89 = vmul.f32 %v40, %v40
    %v90 = vmul.f32 %v41, %v41
    %v91 = vmul.f32 %v42, %v42
    %v92 = vmul.f32 %v43, %v43
    %v93 = vmul.f32 %v44, %v44
    %v94 = vmul.f32 %v45, %v45
    %v95 = vmul.f32 %v46, %v46
    %v96 = vmul.f32 %v47, %v47
    %v97 = vmul.f32 %v48, %v48
    %v98 = vmul.f32 %v49, %v49
    %v99 = vmul.f32 %v50, %v50
    %v100 = vsel %vm55, %v68, 0.0
    %101 = vadd.xlane.f32.xlu0 %v100
    %v102 = vpop.xlane.xlu0 %101
    %v103 = vsel %vm55, %v69, 0.0
    %104 = vadd.xlane.f32.xlu0 %v103
    %v105 = vpop.xlane.xlu0 %104
    %v106 = vsel %vm55, %v70, 0.0
    %107 = vadd.xlane.f32.xlu0 %v106
    %v108 = vpop.xlane.xlu0 %107
    %v109 = vsel %vm55, %v71, 0.0
    %110 = vadd.xlane.f32.xlu0 %v109
    %v111 = vpop.xlane.xlu0 %110
    %v112 = vsel %vm55, %v72, 0.0
    %113 = vadd.xlane.f32.xlu0 %v112
    %v114 = vpop.xlane.xlu0 %113
    %v115 = vsel %vm55, %v73, 0.0
    %116 = vadd.xlane.f32.xlu0 %v115
    %v117 = vpop.xlane.xlu0 %116
    %v118 = vsel %vm55, %v74, 0.0
    %119 = vadd.xlane.f32.xlu0 %v118
    %v120 = vpop.xlane.xlu0 %119
    %v121 = vsel %vm55, %v75, 0.0
    %122 = vadd.xlane.f32.xlu0 %v121
    %v123 = vpop.xlane.xlu0 %122
    %v124 = vsel %vm55, %v76, 0.0
    %125 = vadd.xlane.f32.xlu0 %v124
    %v126 = vpop.xlane.xlu0 %125
    %v127 = vsel %vm55, %v77, 0.0
    %128 = vadd.xlane.f32.xlu0 %v127
    %v129 = vpop.xlane.xlu0 %128
    %v130 = vsel %vm55, %v78, 0.0
    %131 = vadd.xlane.f32.xlu0 %v130
    %v132 = vpop.xlane.xlu0 %131
    %v133 = vsel %vm55, %v79, 0.0
    %134 = vadd.xlane.f32.xlu0 %v133
    %v135 = vpop.xlane.xlu0 %134
    %v136 = vsel %vm55, %v80, 0.0
    %137 = vadd.xlane.f32.xlu0 %v136
    %v138 = vpop.xlane.xlu0 %137
    %v139 = vsel %vm55, %v81, 0.0
    %140 = vadd.xlane.f32.xlu0 %v139
    %v141 = vpop.xlane.xlu0 %140
    %v142 = vsel %vm55, %v82, 0.0
    %143 = vadd.xlane.f32.xlu0 %v142
    %v144 = vpop.xlane.xlu0 %143
    %v145 = vsel %vm55, %v83, 0.0
    %146 = vadd.xlane.f32.xlu0 %v145
    %v147 = vpop.xlane.xlu0 %146
    %v148 = vsel %vm55, %v84, 0.0
    %149 = vadd.xlane.f32.xlu0 %v148
    %v150 = vpop.xlane.xlu0 %149
    %v151 = vsel %vm55, %v85, 0.0
    %152 = vadd.xlane.f32.xlu0 %v151
    %v153 = vpop.xlane.xlu0 %152
    %v154 = vsel %vm55, %v86, 0.0
    %155 = vadd.xlane.f32.xlu0 %v154
    %v156 = vpop.xlane.xlu0 %155
    %v157 = vsel %vm55, %v87, 0.0
    %158 = vadd.xlane.f32.xlu0 %v157
    %v159 = vpop.xlane.xlu0 %158
    %v160 = vsel %vm55, %v88, 0.0
    %161 = vadd.xlane.f32.xlu0 %v160
    %v162 = vpop.xlane.xlu0 %161
    %v163 = vsel %vm55, %v89, 0.0
    %164 = vadd.xlane.f32.xlu0 %v163
    %v165 = vpop.xlane.xlu0 %164
    %v166 = vsel %vm55, %v90, 0.0
    %167 = vadd.xlane.f32.xlu0 %v166
    %v168 = vpop.xlane.xlu0 %167
    %v169 = vsel %vm55, %v91, 0.0
    %170 = vadd.xlane.f32.xlu0 %v169
    %v171 = vpop.xlane.xlu0 %170
    %v172 = vsel %vm55, %v92, 0.0
    %173 = vadd.xlane.f32.xlu0 %v172
    %v174 = vpop.xlane.xlu0 %173
    %v175 = vsel %vm55, %v93, 0.0
    %176 = vadd.xlane.f32.xlu0 %v175
    %v177 = vpop.xlane.xlu0 %176
    %v178 = vsel %vm55, %v94, 0.0
    %179 = vadd.xlane.f32.xlu0 %v178
    %v180 = vpop.xlane.xlu0 %179
    %v181 = vsel %vm55, %v95, 0.0
    %182 = vadd.xlane.f32.xlu0 %v181
    %v183 = vpop.xlane.xlu0 %182
    %v184 = vsel %vm55, %v96, 0.0
    %185 = vadd.xlane.f32.xlu0 %v184
    %v186 = vpop.xlane.xlu0 %185
    %v187 = vsel %vm55, %v97, 0.0
    %188 = vadd.xlane.f32.xlu0 %v187
    %v189 = vpop.xlane.xlu0 %188
    %v190 = vsel %vm55, %v98, 0.0
    %191 = vadd.xlane.f32.xlu0 %v190
    %v192 = vpop.xlane.xlu0 %191
    %v193 = vsel %vm55, %v99, 0.0
    %194 = vadd.xlane.f32.xlu0 %v193
    %v195 = vpop.xlane.xlu0 %194
    %v197 = vsel %vm55, %v15, 0
    %v200 = vsel %vm55, %v16, 0
    %v203 = vsel %vm55, %v19, 0
    %v206 = vsel %vm55, %v20, 0
    %v209 = vsel %vm55, %v21, 0
    %v212 = vsel %vm55, %v22, 0
    %v215 = vsel %vm55, %v23, 0
    %v218 = vsel %vm55, %v24, 0
    %v221 = vsel %vm55, %v25, 0
    %v224 = vsel %vm55, %v26, 0
    %v227 = vsel %vm55, %v27, 0
    %v230 = vsel %vm55, %v28, 0
    %v233 = vsel %vm55, %v29, 0
    %v236 = vsel %vm55, %v30, 0
    %v239 = vsel %vm55, %v31, 0
    %v242 = vsel %vm55, %v32, 0
    %v245 = vsel %vm55, %v33, 0
    %v248 = vsel %vm55, %v34, 0
    %250 = vmatprep.subr.mxu0 0.0
    %251 = vmatpush1.xpose.msra.mxu0 %v248
    %252 = vmatprep.subr.mxu0 0.0
    %253 = vmatpush1.xpose.msra.mxu0 %v245
    %254 = vmatprep.subr.mxu0 0.0
    %255 = vmatpush1.xpose.msra.mxu0 %v242
    %256 = vmatprep.subr.mxu0 0.0
    %257 = vmatpush1.xpose.msra.mxu0 %v239
    %258 = vmatprep.subr.mxu0 0.0
    %259 = vmatpush1.xpose.msra.mxu0 %v236
    %260 = vmatprep.subr.mxu0 0.0
    %261 = vmatpush1.xpose.msra.mxu0 %v233
    %262 = vmatprep.subr.mxu0 0.0
    %263 = vmatpush1.xpose.msra.mxu0 %v230
    %264 = vmatprep.subr.mxu0 0.0
    %265 = vmatpush1.xpose.msra.mxu0 %v227
    %266 = vmatprep.subr.mxu0 0.0
    %267 = vmatpush1.xpose.msra.mxu0 %v224
    %268 = vmatprep.subr.mxu0 0.0
    %269 = vmatpush1.xpose.msra.mxu0 %v221
    %270 = vmatprep.subr.mxu0 0.0
    %271 = vmatpush1.xpose.msra.mxu0 %v218
    %272 = vmatprep.subr.mxu0 0.0
    %273 = vmatpush1.xpose.msra.mxu0 %v215
    %274 = vmatprep.subr.mxu0 0.0
    %275 = vmatpush1.xpose.msra.mxu0 %v212
    %276 = vmatprep.subr.mxu0 0.0
    %277 = vmatpush1.xpose.msra.mxu0 %v209
    %278 = vmatprep.subr.mxu0 0.0
    %279 = vmatpush1.xpose.msra.mxu0 %v206
    %280 = vmatprep.subr.mxu0 0.0
    %281 = vmatpush1.xpose.msra.mxu0 %v203
    %282 = vmatprep.subr.mxu0 0.0
    %283 = vmatpush2.xpose.msra.mxu0 0.0
    %284 = vmatprep.subr.mxu0 0.0
    %285 = vmatpush2.xpose.msra.mxu0 0.0
    %286 = vmatprep.subr.mxu0 0.0
    %287 = vmatpush2.xpose.msra.mxu0 0.0
    %288 = vmatprep.subr.mxu0 0.0
    %289 = vmatpush2.xpose.msra.mxu0 0.0
    %290 = vmatprep.subr.mxu0 0.0
    %291 = vmatpush2.xpose.msra.mxu0 0.0
    %292 = vmatprep.subr.mxu0 0.0
    %293 = vmatpush2.xpose.msra.mxu0 0.0
    %294 = vmatprep.subr.mxu0 0.0
    %295 = vmatpush2.xpose.msra.mxu0 0.0
    %296 = vmatprep.subr.mxu0 0.0
    %297 = vmatpush2.xpose.msra.mxu0 0.0
    %298 = vmatprep.subr.mxu0 0.0
    %299 = vmatpush2.xpose.msra.mxu0 0.0
    %300 = vmatprep.subr.mxu0 0.0
    %301 = vmatpush2.xpose.msra.mxu0 0.0
    %302 = vmatprep.subr.mxu0 0.0
    %303 = vmatpush2.xpose.msra.mxu0 0.0
    %304 = vmatprep.subr.mxu0 0.0
    %305 = vmatpush2.xpose.msra.mxu0 0.0
    %306 = vmatprep.subr.mxu0 0.0
    %307 = vmatpush2.xpose.msra.mxu0 0.0
    %308 = vmatprep.subr.mxu0 0.0
    %309 = vmatpush2.xpose.msra.mxu0 0.0
    %310 = vmatprep.subr.mxu0 0.0
    %311 = vmatpush2.xpose.msra.mxu0 0.0
    %312 = vmatprep.subr.mxu0 0.0
    %313 = vmatpush2.xpose.msra.mxu0 0.0
    %314 = vmatprep.mubr.f32.mxu0 0.0
    %315 = vmatmul.mubr.f32.gmra.mxu0 %v197
    %v316 = vpop.f32.mrf.mxu0
    %v317 = vadd.f32 0.0, %v316
    %v318 = vpop.f32.mrf.mxu0
    %319 = vmatprep.mubr.f32.mxu0 0.0
    %320 = vmatmul.mubr.f32.gmra.mxu0 %v200
    %v321 = vpop.f32.mrf.mxu0
    %v322 = vadd.f32 0.0, %v321
    %v323 = vpop.f32.mrf.mxu0
    %324 = vdwg.mxu0
    %v326 = vsel %vm55, %v17, 0
    %v329 = vsel %vm55, %v18, 0
    %v332 = vsel %vm55, %v35, 0
    %v335 = vsel %vm55, %v36, 0
    %v338 = vsel %vm55, %v37, 0
    %v341 = vsel %vm55, %v38, 0
    %v344 = vsel %vm55, %v39, 0
    %v347 = vsel %vm55, %v40, 0
    %v350 = vsel %vm55, %v41, 0
    %v353 = vsel %vm55, %v42, 0
    %v356 = vsel %vm55, %v43, 0
    %v359 = vsel %vm55, %v44, 0
    %v362 = vsel %vm55, %v45, 0
    %v365 = vsel %vm55, %v46, 0
    %v368 = vsel %vm55, %v47, 0
    %v371 = vsel %vm55, %v48, 0
    %v374 = vsel %vm55, %v49, 0
    %v377 = vsel %vm55, %v50, 0
    %379 = vmatprep.subr.mxu0 0.0
    %380 = vmatpush1.xpose.msra.mxu0 %v377
    %381 = vmatprep.subr.mxu0 0.0
    %382 = vmatpush1.xpose.msra.mxu0 %v374
    %383 = vmatprep.subr.mxu0 0.0
    %384 = vmatpush1.xpose.msra.mxu0 %v371
    %385 = vmatprep.subr.mxu0 0.0
    %386 = vmatpush1.xpose.msra.mxu0 %v368
    %387 = vmatprep.subr.mxu0 0.0
    %388 = vmatpush1.xpose.msra.mxu0 %v365
    %389 = vmatprep.subr.mxu0 0.0
    %390 = vmatpush1.xpose.msra.mxu0 %v362
    %391 = vmatprep.subr.mxu0 0.0
    %392 = vmatpush1.xpose.msra.mxu0 %v359
    %393 = vmatprep.subr.mxu0 0.0
    %394 = vmatpush1.xpose.msra.mxu0 %v356
    %395 = vmatprep.subr.mxu0 0.0
    %396 = vmatpush1.xpose.msra.mxu0 %v353
    %397 = vmatprep.subr.mxu0 0.0
    %398 = vmatpush1.xpose.msra.mxu0 %v350
    %399 = vmatprep.subr.mxu0 0.0
    %400 = vmatpush1.xpose.msra.mxu0 %v347
    %401 = vmatprep.subr.mxu0 0.0
    %402 = vmatpush1.xpose.msra.mxu0 %v344
    %403 = vmatprep.subr.mxu0 0.0
    %404 = vmatpush1.xpose.msra.mxu0 %v341
    %405 = vmatprep.subr.mxu0 0.0
    %406 = vmatpush1.xpose.msra.mxu0 %v338
    %407 = vmatprep.subr.mxu0 0.0
    %408 = vmatpush1.xpose.msra.mxu0 %v335
    %409 = vmatprep.subr.mxu0 0.0
    %410 = vmatpush1.xpose.msra.mxu0 %v332
    %411 = vmatprep.subr.mxu0 0.0
    %412 = vmatpush2.xpose.msra.mxu0 0.0
    %413 = vmatprep.subr.mxu0 0.0
    %414 = vmatpush2.xpose.msra.mxu0 0.0
    %415 = vmatprep.subr.mxu0 0.0
    %416 = vmatpush2.xpose.msra.mxu0 0.0
    %417 = vmatprep.subr.mxu0 0.0
    %418 = vmatpush2.xpose.msra.mxu0 0.0
    %419 = vmatprep.subr.mxu0 0.0
    %420 = vmatpush2.xpose.msra.mxu0 0.0
    %421 = vmatprep.subr.mxu0 0.0
    %422 = vmatpush2.xpose.msra.mxu0 0.0
    %423 = vmatprep.subr.mxu0 0.0
    %424 = vmatpush2.xpose.msra.mxu0 0.0
    %425 = vmatprep.subr.mxu0 0.0
    %426 = vmatpush2.xpose.msra.mxu0 0.0
    %427 = vmatprep.subr.mxu0 0.0
    %428 = vmatpush2.xpose.msra.mxu0 0.0
    %429 = vmatprep.subr.mxu0 0.0
    %430 = vmatpush2.xpose.msra.mxu0 0.0
    %431 = vmatprep.subr.mxu0 0.0
    %432 = vmatpush2.xpose.msra.mxu0 0.0
    %433 = vmatprep.subr.mxu0 0.0
    %434 = vmatpush2.xpose.msra.mxu0 0.0
    %435 = vmatprep.subr.mxu0 0.0
    %436 = vmatpush2.xpose.msra.mxu0 0.0
    %437 = vmatprep.subr.mxu0 0.0
    %438 = vmatpush2.xpose.msra.mxu0 0.0
    %439 = vmatprep.subr.mxu0 0.0
    %440 = vmatpush2.xpose.msra.mxu0 0.0
    %441 = vmatprep.subr.mxu0 0.0
    %442 = vmatpush2.xpose.msra.mxu0 0.0
    %443 = vmatprep.mubr.f32.mxu0 0.0
    %444 = vmatmul.mubr.f32.gmra.mxu0 %v326
    %v445 = vpop.f32.mrf.mxu0
    %v446 = vadd.f32 0.0, %v445
    %v447 = vpop.f32.mrf.mxu0
    %448 = vmatprep.mubr.f32.mxu0 0.0
    %449 = vmatmul.mubr.f32.gmra.mxu0 %v329
    %v450 = vpop.f32.mrf.mxu0
    %v451 = vadd.f32 0.0, %v450
    %v452 = vpop.f32.mrf.mxu0
    %453 = vdwg.mxu0
    %v486 = vlaneseq
    %v487 = vand.u32 %v486, 127
    %v488 = vlaneseq
    %v489 = vshrl.u32 %v488, 7
    %v490 = vsub.s32 %v487, %v489
    %v491 = vrot.slane %v102, %v490
    %v492 = vadd.s32 %v487, 4294967288
    %v493 = vlaneseq
    %v494 = vshrl.u32 %v493, 7
    %v495 = vsub.s32 %v492, %v494
    %v496 = vrot.slane %v105, %v495
    %vm497 = vcmask 130112
    %v498 = vsel %vm497, %v496, %v491
    %v499 = vadd.s32 %v487, 4294967280
    %v500 = vlaneseq
    %v501 = vshrl.u32 %v500, 7
    %v502 = vsub.s32 %v499, %v501
    %v503 = vrot.slane %v108, %v502
    %vm504 = vcmask 195712
    %v505 = vsel %vm504, %v503, %v498
    %v506 = vadd.s32 %v487, 4294967272
    %v507 = vlaneseq
    %v508 = vshrl.u32 %v507, 7
    %v509 = vsub.s32 %v506, %v508
    %v510 = vrot.slane %v111, %v509
    %vm511 = vcmask 261312
    %v512 = vsel %vm511, %v510, %v505
    %v513 = vadd.s32 %v487, 4294967264
    %v514 = vlaneseq
    %v515 = vshrl.u32 %v514, 7
    %v516 = vsub.s32 %v513, %v515
    %v517 = vrot.slane %v114, %v516
    %vm518 = vcmask 326912
    %v519 = vsel %vm518, %v517, %v512
    %v520 = vadd.s32 %v487, 4294967256
    %v521 = vlaneseq
    %v522 = vshrl.u32 %v521, 7
    %v523 = vsub.s32 %v520, %v522
    %v524 = vrot.slane %v117, %v523
    %vm525 = vcmask 392512
    %v526 = vsel %vm525, %v524, %v519
    %v527 = vadd.s32 %v487, 4294967248
    %v528 = vlaneseq
    %v529 = vshrl.u32 %v528, 7
    %v530 = vsub.s32 %v527, %v529
    %v531 = vrot.slane %v120, %v530
    %vm532 = vcmask 458112
    %v533 = vsel %vm532, %v531, %v526
    %v534 = vadd.s32 %v487, 4294967240
    %v535 = vlaneseq
    %v536 = vshrl.u32 %v535, 7
    %v537 = vsub.s32 %v534, %v536
    %v538 = vrot.slane %v123, %v537
    %vm539 = vcmask 523712
    %v540 = vsel %vm539, %v538, %v533
    %v541 = vadd.s32 %v487, 4294967232
    %v542 = vlaneseq
    %v543 = vshrl.u32 %v542, 7
    %v544 = vsub.s32 %v541, %v543
    %v545 = vrot.slane %v126, %v544
    %vm546 = vcmask 589312
    %v547 = vsel %vm546, %v545, %v540
    %v548 = vadd.s32 %v487, 4294967224
    %v549 = vlaneseq
    %v550 = vshrl.u32 %v549, 7
    %v551 = vsub.s32 %v548, %v550
    %v552 = vrot.slane %v129, %v551
    %vm553 = vcmask 654912
    %v554 = vsel %vm553, %v552, %v547
    %v555 = vadd.s32 %v487, 4294967216
    %v556 = vlaneseq
    %v557 = vshrl.u32 %v556, 7
    %v558 = vsub.s32 %v555, %v557
    %v559 = vrot.slane %v132, %v558
    %vm560 = vcmask 720512
    %v561 = vsel %vm560, %v559, %v554
    %v562 = vadd.s32 %v487, 4294967208
    %v563 = vlaneseq
    %v564 = vshrl.u32 %v563, 7
    %v565 = vsub.s32 %v562, %v564
    %v566 = vrot.slane %v135, %v565
    %vm567 = vcmask 786112
    %v568 = vsel %vm567, %v566, %v561
    %v569 = vadd.s32 %v487, 4294967200
    %v570 = vlaneseq
    %v571 = vshrl.u32 %v570, 7
    %v572 = vsub.s32 %v569, %v571
    %v573 = vrot.slane %v138, %v572
    %vm574 = vcmask 851712
    %v575 = vsel %vm574, %v573, %v568
    %v576 = vadd.s32 %v487, 4294967192
    %v577 = vlaneseq
    %v578 = vshrl.u32 %v577, 7
    %v579 = vsub.s32 %v576, %v578
    %v580 = vrot.slane %v141, %v579
    %vm581 = vcmask 917312
    %v582 = vsel %vm581, %v580, %v575
    %v583 = vadd.s32 %v487, 4294967184
    %v584 = vlaneseq
    %v585 = vshrl.u32 %v584, 7
    %v586 = vsub.s32 %v583, %v585
    %v587 = vrot.slane %v144, %v586
    %vm588 = vcmask 982912
    %v589 = vsel %vm588, %v587, %v582
    %v590 = vadd.s32 %v487, 4294967176
    %v591 = vlaneseq
    %v592 = vshrl.u32 %v591, 7
    %v593 = vsub.s32 %v590, %v592
    %v594 = vrot.slane %v147, %v593
    %vm595 = vcmask 1048512
    %v596 = vsel %vm595, %v594, %v589
    %v597 = vlaneseq
    %v598 = vshrl.u32 %v597, 7
    %v599 = vsub.s32 %v487, %v598
    %v600 = vrot.slane %v150, %v599
    %v601 = vlaneseq
    %v602 = vshrl.u32 %v601, 7
    %v603 = vsub.s32 %v492, %v602
    %v604 = vrot.slane %v153, %v603
    %v605 = vsel %vm497, %v604, %v600
    %v606 = vlaneseq
    %v607 = vshrl.u32 %v606, 7
    %v608 = vsub.s32 %v499, %v607
    %v609 = vrot.slane %v156, %v608
    %v610 = vsel %vm504, %v609, %v605
    %v611 = vlaneseq
    %v612 = vshrl.u32 %v611, 7
    %v613 = vsub.s32 %v506, %v612
    %v614 = vrot.slane %v159, %v613
    %v615 = vsel %vm511, %v614, %v610
    %v616 = vlaneseq
    %v617 = vshrl.u32 %v616, 7
    %v618 = vsub.s32 %v513, %v617
    %v619 = vrot.slane %v162, %v618
    %v620 = vsel %vm518, %v619, %v615
    %v621 = vlaneseq
    %v622 = vshrl.u32 %v621, 7
    %v623 = vsub.s32 %v520, %v622
    %v624 = vrot.slane %v165, %v623
    %v625 = vsel %vm525, %v624, %v620
    %v626 = vlaneseq
    %v627 = vshrl.u32 %v626, 7
    %v628 = vsub.s32 %v527, %v627
    %v629 = vrot.slane %v168, %v628
    %v630 = vsel %vm532, %v629, %v625
    %v631 = vlaneseq
    %v632 = vshrl.u32 %v631, 7
    %v633 = vsub.s32 %v534, %v632
    %v634 = vrot.slane %v171, %v633
    %v635 = vsel %vm539, %v634, %v630
    %v636 = vlaneseq
    %v637 = vshrl.u32 %v636, 7
    %v638 = vsub.s32 %v541, %v637
    %v639 = vrot.slane %v174, %v638
    %v640 = vsel %vm546, %v639, %v635
    %v641 = vlaneseq
    %v642 = vshrl.u32 %v641, 7
    %v643 = vsub.s32 %v548, %v642
    %v644 = vrot.slane %v177, %v643
    %v645 = vsel %vm553, %v644, %v640
    %v646 = vlaneseq
    %v647 = vshrl.u32 %v646, 7
    %v648 = vsub.s32 %v555, %v647
    %v649 = vrot.slane %v180, %v648
    %v650 = vsel %vm560, %v649, %v645
    %v651 = vlaneseq
    %v652 = vshrl.u32 %v651, 7
    %v653 = vsub.s32 %v562, %v652
    %v654 = vrot.slane %v183, %v653
    %v655 = vsel %vm567, %v654, %v650
    %v656 = vlaneseq
    %v657 = vshrl.u32 %v656, 7
    %v658 = vsub.s32 %v569, %v657
    %v659 = vrot.slane %v186, %v658
    %v660 = vsel %vm574, %v659, %v655
    %v661 = vlaneseq
    %v662 = vshrl.u32 %v661, 7
    %v663 = vsub.s32 %v576, %v662
    %v664 = vrot.slane %v189, %v663
    %v665 = vsel %vm581, %v664, %v660
    %v666 = vlaneseq
    %v667 = vshrl.u32 %v666, 7
    %v668 = vsub.s32 %v583, %v667
    %v669 = vrot.slane %v192, %v668
    %v670 = vsel %vm588, %v669, %v665
    %v671 = vlaneseq
    %v672 = vshrl.u32 %v671, 7
    %v673 = vsub.s32 %v590, %v672
    %v674 = vrot.slane %v195, %v673
    %v675 = vsel %vm595, %v674, %v670
    %vm676 = vcmask 1042434
    %v677 = vsel %vm676, %v596, %v596
    %vm678 = vcmask 1043459
    %v679 = vsel %vm678, %v596, %v677
    %vm680 = vcmask 1044484
    %v681 = vsel %vm680, %v596, %v679
    %vm682 = vcmask 1045509
    %v683 = vsel %vm682, %v596, %v681
    %vm684 = vcmask 1046534
    %v685 = vsel %vm684, %v596, %v683
    %vm686 = vcmask 1047559
    %v687 = vsel %vm686, %v596, %v685
    %v688 = vsel %vm676, %v675, %v675
    %v689 = vsel %vm678, %v675, %v688
    %v690 = vsel %vm680, %v675, %v689
    %v691 = vsel %vm682, %v675, %v690
    %v692 = vsel %vm684, %v675, %v691
    %v693 = vsel %vm686, %v675, %v692
    %v696 = vadd.f32 %v58, %v687
    %v697 = vadd.f32 %v61, %v687
    %v698 = vadd.f32 %v64, %v693
    %v699 = vadd.f32 %v67, %v693
    %v700 = vmul.f32 %v317, 2.0
    %v701 = vmul.f32 %v322, 2.0
    %v702 = vmul.f32 %v446, 2.0
    %v703 = vmul.f32 %v451, 2.0
    %v704 = vsub.f32 %v696, %v700
    %v705 = vsub.f32 %v697, %v701
    %v706 = vsub.f32 %v698, %v702
    %v707 = vsub.f32 %v699, %v703
    %v708 = vmax.f32 %v704, 0.0
    %v709 = vmax.f32 %v705, 0.0
    %v710 = vmax.f32 %v706, 0.0
    %v711 = vmax.f32 %v707, 0.0
    %712 = vst [vmem:[%s4] sm:$0xff] %v708
    %713 = vst [vmem:[%s4 + $0x8] sm:$0xff] %v709
    %714 = vst [vmem:[%s4 + $0x10] sm:$0xff] %v710
    %715 = vst [vmem:[%s4 + $0x18] sm:$0xff] %v711
    %v716 = vmul.f32 %v708, 10.0
    %v717 = vmul.f32 %v709, 10.0
    %v718 = vmul.f32 %v710, 10.0
    %v719 = vmul.f32 %v711, 10.0
    %vm720 = vcmp.ge.s32.totalorder %v487, 8
    %v721 = vsel %vm720, 1e+30, %v716
    %v722 = vsel %vm720, 1e+30, %v717
    %v723 = vsel %vm720, 1e+30, %v718
    %v724 = vsel %vm720, 1e+30, %v719
    %vm725 = vcmp.lt.s32.totalorder %v487, 8
    // While loop
    $region10: #{sinkhorn_distance.1} parent=1 // loop_pre_header
      _
    $region11: #{sinkhorn_distance.1} parent=1 // loop_header
      %s727 = sphi 0, %s871
      %s728 = sphi 1e+30, %s870
      %v729 = vphi 0.0, %v785
      %v730 = vphi 0.0, %v786
      %v731 = vphi 0.0, %v787
      %v732 = vphi 0.0, %v788
      %v733 = vphi 0.0, %v843
      %v734 = vphi 0.0, %v844
      %p735 = scmp.lt.s32.totalorder %s727, 100
      %p736 = scmp.ge.f32.partialorder %s728, 0.1
      %p737 = pnand %p735, %p736
      %p738 = pneg %p737
    $region12: #{sinkhorn_distance.1} parent=1 // loop_header_branch
      %740 = sbr.rel (%p737) target = $region16
    $region13: #{sinkhorn_distance.1} parent=1 // loop_body
      %v741 = vsub.f32 %v733, %v721
      %v742 = vsub.f32 %v733, %v722
      %v743 = vsub.f32 %v734, %v723
      %v744 = vsub.f32 %v734, %v724
      %745 = vmax.xlane.f32.xlu0 %v741
      %v746 = vpop.xlane.xlu0 %745
      %747 = vmax.xlane.f32.xlu0 %v742
      %v748 = vpop.xlane.xlu0 %747
      %749 = vmax.xlane.f32.xlu0 %v743
      %v750 = vpop.xlane.xlu0 %749
      %751 = vmax.xlane.f32.xlu0 %v744
      %v752 = vpop.xlane.xlu0 %751
      %v753 = vsub.f32 %v741, %v746
      %v754 = vsub.f32 %v742, %v748
      %v755 = vsub.f32 %v743, %v750
      %v756 = vsub.f32 %v744, %v752
      %v757 = vmul.f32 %v753, 1.442695
      %v758 = vpow.pop %v757
      %v759 = vmul.f32 %v754, 1.442695
      %v760 = vpow.pop %v759
      %v761 = vmul.f32 %v755, 1.442695
      %v762 = vpow.pop %v761
      %v763 = vmul.f32 %v756, 1.442695
      %v764 = vpow.pop %v763
      %765 = vadd.xlane.f32.xlu0 %v758
      %v766 = vpop.xlane.xlu0 %765
      %767 = vadd.xlane.f32.xlu0 %v760
      %v768 = vpop.xlane.xlu0 %767
      %769 = vadd.xlane.f32.xlu0 %v762
      %v770 = vpop.xlane.xlu0 %769
      %771 = vadd.xlane.f32.xlu0 %v764
      %v772 = vpop.xlane.xlu0 %771
      %v773 = vlog2.pop %v766
      %v774 = vmul.f32 %v773, 0.6931472
      %v775 = vlog2.pop %v768
      %v776 = vmul.f32 %v775, 0.6931472
      %v777 = vlog2.pop %v770
      %v778 = vmul.f32 %v777, 0.6931472
      %v779 = vlog2.pop %v772
      %v780 = vmul.f32 %v779, 0.6931472
      %v781 = vadd.f32 %v746, %v774
      %v782 = vadd.f32 %v748, %v776
      %v783 = vadd.f32 %v750, %v778
      %v784 = vadd.f32 %v752, %v780
      %v785 = vsub.f32 -2.7725885, %v781
      %v786 = vsub.f32 -2.7725885, %v782
      %v787 = vsub.f32 -2.7725885, %v783
      %v788 = vsub.f32 -2.7725885, %v784
      %v789 = vadd.f32 %v785, %v741
      %v790 = vadd.f32 %v786, %v742
      %v791 = vadd.f32 %v787, %v743
      %v792 = vadd.f32 %v788, %v744
      %v793 = vmax.f32 %v789, %v790
      %v794 = vrot.slane %v793, 4
      %v795 = vmax.f32 %v793, %v794
      %v796 = vrot.slane %v795, 2
      %v797 = vmax.f32 %v795, %v796
      %v798 = vrot.slane %v797, 1
      %v799 = vmax.f32 %v797, %v798
      %v800 = vmax.f32 %v791, %v792
      %v801 = vrot.slane %v800, 4
      %v802 = vmax.f32 %v800, %v801
      %v803 = vrot.slane %v802, 2
      %v804 = vmax.f32 %v802, %v803
      %v805 = vrot.slane %v804, 1
      %v806 = vmax.f32 %v804, %v805
      %v807 = vsub.f32 %v789, %v799
      %v808 = vsub.f32 %v790, %v799
      %v809 = vsub.f32 %v791, %v806
      %v810 = vsub.f32 %v792, %v806
      %v811 = vmul.f32 %v807, 1.442695
      %v812 = vpow.pop %v811
      %v813 = vmul.f32 %v808, 1.442695
      %v814 = vpow.pop %v813
      %v815 = vmul.f32 %v809, 1.442695
      %v816 = vpow.pop %v815
      %v817 = vmul.f32 %v810, 1.442695
      %v818 = vpow.pop %v817
      %v819 = vadd.f32 %v812, %v814
      %v820 = vrot.slane %v819, 4
      %v821 = vadd.f32 %v819, %v820
      %v822 = vrot.slane %v821, 2
      %v823 = vadd.f32 %v821, %v822
      %v824 = vrot.slane %v823, 1
      %v825 = vadd.f32 %v823, %v824
      %v826 = vadd.f32 %v816, %v818
      %v827 = vrot.slane %v826, 4
      %v828 = vadd.f32 %v826, %v827
      %v829 = vrot.slane %v828, 2
      %v830 = vadd.f32 %v828, %v829
      %v831 = vrot.slane %v830, 1
      %v832 = vadd.f32 %v830, %v831
      %v833 = vlog2.pop %v825
      %v834 = vmul.f32 %v833, 0.6931472
      %v835 = vlog2.pop %v832
      %v836 = vmul.f32 %v835, 0.6931472
      %v837 = vadd.f32 %v799, %v834
      %v838 = vadd.f32 %v806, %v836
      %v839 = vsub.f32 -2.0794415, %v837
      %v840 = vsub.f32 -2.0794415, %v838
      %v841 = vadd.f32 %v839, %v733
      %v842 = vadd.f32 %v840, %v734
      %v843 = vsel %vm725, %v841, 0.0
      %v844 = vsel %vm725, %v842, 0.0
      %v845 = vsub.f32 %v785, %v729
      %v846 = vsub.f32 %v786, %v730
      %v847 = vsub.f32 %v787, %v731
      %v848 = vsub.f32 %v788, %v732
      %v849 = vand.u32 2147483647, %v845
      %v850 = vand.u32 2147483647, %v846
      %v851 = vand.u32 2147483647, %v847
      %v852 = vand.u32 2147483647, %v848
      %vm853 = vcmask 7168
      %v854 = vsel %vm853, %v849, 0.0
      %v855 = vsel %vm853, %v850, 0.0
      %v856 = vadd.f32 %v854, %v855
      %v857 = vsel %vm853, %v851, 0.0
      %v858 = vadd.f32 %v856, %v857
      %v859 = vsel %vm853, %v852, 0.0
      %v860 = vadd.f32 %v858, %v859
      %861 = vadd.xlane.f32.xlu0 %v860
      %v862 = vpop.xlane.xlu0 %861
      %v863 = vrot.slane %v862, 4
      %v864 = vadd.f32 %v862, %v863
      %v865 = vrot.slane %v864, 2
      %v866 = vadd.f32 %v864, %v865
      %v867 = vrot.slane %v866, 1
      %v868 = vadd.f32 %v866, %v867
      %s869 = vtos %v868
      %s870 = smul.f32 %s869, 0.05
      %s871 = sadd.s32 %s727, 1
    $region14: #{sinkhorn_distance.1} parent=1 // loop_footer
      _
    $region15: #{sinkhorn_distance.1} parent=1 // loop_footer_branch
      %726 = sbr.rel target = $region11
    $region16: #{sinkhorn_distance.1} parent=1 // loop_exit
      _
    %v872 = vsub.f32 %v729, %v721
    %v873 = vsub.f32 %v730, %v722
    %v874 = vsub.f32 %v731, %v723
    %v875 = vsub.f32 %v732, %v724
    %v876 = vadd.f32 %v872, %v733
    %v877 = vadd.f32 %v873, %v733
    %v878 = vadd.f32 %v874, %v734
    %v879 = vadd.f32 %v875, %v734
    %v880 = vmul.f32 %v876, 1.442695
    %v881 = vpow.pop %v880
    %v882 = vmul.f32 %v877, 1.442695
    %v883 = vpow.pop %v882
    %v884 = vmul.f32 %v878, 1.442695
    %v885 = vpow.pop %v884
    %v886 = vmul.f32 %v879, 1.442695
    %v887 = vpow.pop %v886
    %888 = vst [vmem:[%s3] sm:$0xff] %v881
    %889 = vst [vmem:[%s3 + $0x8] sm:$0xff] %v883
    %890 = vst [vmem:[%s3 + $0x10] sm:$0xff] %v885
    %891 = vst [vmem:[%s3 + $0x18] sm:$0xff] %v887
    %v892 = vmul.f32 %v881, %v721
    %v893 = vmul.f32 %v883, %v722
    %v894 = vmul.f32 %v885, %v723
    %v895 = vmul.f32 %v887, %v724
    %v896 = vadd.f32 %v892, %v893
    %v897 = vadd.f32 %v896, %v894
    %v898 = vadd.f32 %v897, %v895
    %899 = vadd.xlane.f32.xlu0 %v898
    %v900 = vpop.xlane.xlu0 %899
    %v901 = vrot.slane %v900, 4
    %v902 = vadd.f32 %v900, %v901
    %v903 = vrot.slane %v902, 2
    %v904 = vadd.f32 %v902, %v903
    %v905 = vrot.slane %v904, 1
    %v906 = vadd.f32 %v904, %v905
    %s907 = vtos %v906
    %s908 = smul.f32 %s907, 0.05
    %s909 = scalar_lea.smem [#allocation2], 0
    %910 = sst [smem:[%s909]] %s908
    // Predicated region
    $region17: #{sinkhorn_distance.1} parent=1 // pred_check
      _
    $region18: #{sinkhorn_distance.1} parent=1 // pred_check_branch
      %912 = sbr.rel (0) target = $region20
    $region19: #{sinkhorn_distance.1} parent=1 // pred_region
      %s914 = ssub.s32 16, 16
      %915 = vsyncadd [#allocation3], %s914
      %918 = dma.smem_to_hbm [#allocation2], 16, %s2, [#allocation3]
    $region20: #{sinkhorn_distance.1} parent=1 // pred_fallthru
      _
    // Predicated region
    $region21: #{sinkhorn_distance.1} parent=1 // pred_check
      _
    $region22: #{sinkhorn_distance.1} parent=1 // pred_check_branch
      %920 = sbr.rel (0) target = $region24
    $region23: #{sinkhorn_distance.1} parent=1 // pred_region
      _
    $region24: #{sinkhorn_distance.1} parent=1 // pred_fallthru
      _
    // Predicated region
    $region25: #{sinkhorn_distance.1} parent=1 // pred_check
      _
    $region26: #{sinkhorn_distance.1} parent=1 // pred_check_branch
      %922 = sbr.rel (0) target = $region28
    $region27: #{sinkhorn_distance.1} parent=1 // pred_region
      _
    $region28: #{sinkhorn_distance.1} parent=1 // pred_fallthru
      _
    // Predicated region
    $region29: #{sinkhorn_distance.1} parent=1 // pred_check
      _
    $region30: #{sinkhorn_distance.1} parent=1 // pred_check_branch
      %924 = sbr.rel (0) target = $region32
    $region31: #{sinkhorn_distance.1} parent=1 // pred_region
      %925 = dma.done [#allocation3], 16
    $region32: #{sinkhorn_distance.1} parent=1 // pred_fallthru
      _
    // Predicated region
    $region33: #{sinkhorn_distance.1} parent=1 // pred_check
      _
    $region34: #{sinkhorn_distance.1} parent=1 // pred_check_branch
      %927 = sbr.rel (0) target = $region36
    $region35: #{sinkhorn_distance.1} parent=1 // pred_region
      _
    $region36: #{sinkhorn_distance.1} parent=1 // pred_fallthru
      _
    // Predicated region
    $region37: #{sinkhorn_distance.1} parent=1 // pred_check
      _
    $region38: #{sinkhorn_distance.1} parent=1 // pred_check_branch
      %929 = sbr.rel (0) target = $region40
    $region39: #{sinkhorn_distance.1} parent=1 // pred_region
      _
    $region40: #{sinkhorn_distance.1} parent=1 // pred_fallthru
      _
    %930 = sfence
    %931 = vsyncpa [#allocation3], 1

</llo_original>
